<compile_context>
chip_gen: v6e
topology: v6e:2x2x1
jax: 0.10.0
libtpu: 0.0.40
codegen_flags: <defaults>
</compile_context>

<pallas_src>
import functools

import jax
import jax.numpy as jnp
from jax.experimental import pallas as pl
from jax.experimental.pallas import tpu as pltpu


def _round_up(x, m):
    return ((x + m - 1) // m) * m


# ----------------------------------------------------------------------------
# Pallas kernel: one fused state-side matmul + masked nonlinearities + the
# b2 hidden-layer matmul folded into the same slab, one full-width store.
# ----------------------------------------------------------------------------
def hyper_net_kernel(
    state_ref,        # (tb, S)
    wcat_ref,         # (S, N)   columns: [w1 | w2 | b1 | b2_hidden | zero pad]
    bcat_ref,         # (1, N)
    w2pad_ref,        # (N, N)   non-zero block: rows = hidden segment, cols = b2 lanes
    b2pad_ref,        # (1, N)   non-zero only on the b2 lanes
    out_ref,          # (tb, N)
    *,
    abs_cols,         # static: columns [0, abs_cols) get |.| (w1 and w2 segments)
    cat_cols,         # static: first padding lane (where b2 is placed)
):
    s = state_ref[...]

    # One fused matmul for w1 / w2 / b1 / b2-hidden (MXU, f32 accumulate).
    fused = (
        jnp.dot(s, wcat_ref[...], preferred_element_type=jnp.float32)
        + bcat_ref[...]
    )

    # Static per-column nonlinearity mask (trace-time constant): abs on the
    # w1/w2 segments, identity on b1/b2_hidden, zero on the lanes where b2
    # will be added.  Full-vreg VPU work, no masked stores.
    col = jax.lax.broadcasted_iota(jnp.int32, fused.shape, 1)
    y = jnp.where(
        col < abs_cols,
        jnp.abs(fused),
        jnp.where(col < cat_cols, fused, 0.0),
    )

    # b2 = ReLU(hidden segment) @ b2h_w + b2h_b.  ReLU is applied to the whole
    # slab; the zero rows of w2pad neutralize every non-hidden column, and the
    # zero columns of w2pad / b2pad keep b2 zero outside its own lanes.
    h = jnp.maximum(fused, 0.0)
    b2 = (
        jnp.dot(h, w2pad_ref[...], preferred_element_type=jnp.float32)
        + b2pad_ref[...]
    )

    # Single lane-dense, unmasked, full-width store.
    out_ref[...] = y + b2


# ----------------------------------------------------------------------------
# Batch tiling: big tiles (amortize ~0.35 us/step), grid >= 2 when the batch is
# large enough for megacore, and no wrapper-side padding unless unavoidable.
# ----------------------------------------------------------------------------
def _choose_batch_tiling(B):
    if B < 512:
        return B, B                         # one tile; tb == full dim is always legal
    for tb in (2048, 1024, 512, 256):       # largest clean divisor with grid >= 2
        if B % tb == 0 and B // tb >= 2:
            return tb, B
    if B % 16 == 0:                         # split in two (megacore) without padding
        return B // 2, B
    if B <= 4096:
        return B, B                         # single tile, still no padding
    return 1024, _round_up(B, 1024)         # rare: awkward huge batch -> pad once


# ----------------------------------------------------------------------------
# Wrapper: pallas_call + (fusable) slicing / reshaping of the output slab.
# ----------------------------------------------------------------------------
def hyper_network_forward(state, params, hyper_shapes, b2_hidden):
    B, S = state.shape
    out_w = params["w_cat"].shape[1]         # padded slab width (multiple of 128)

    w1_size = hyper_shapes["w1_size"]
    w2_size = hyper_shapes["w2_size"]
    b1_size = hyper_shapes["b1_size"]
    b2_size = hyper_shapes["b2_size"]
    cat_cols = w1_size + w2_size + b1_size + b2_hidden   # b2 lanes start here

    tb, B_pad = _choose_batch_tiling(B)
    state_p = state if B_pad == B else jnp.pad(state, ((0, B_pad - B), (0, 0)))
    grid = (B_pad // tb,)

    kernel = functools.partial(
        hyper_net_kernel, abs_cols=w1_size + w2_size, cat_cols=cat_cols
    )

    # Scoped-VMEM guard (v5e default is 16 MiB): only set an explicit limit
    # when the double-buffered tiles would actually approach it.
    vmem_needed = 4 * (
        2 * tb * (S + out_w)                      # state + output tiles (x2 buffers)
        + 2 * (S * out_w + out_w * out_w + 2 * out_w)  # resident weights/biases
    )
    cp_kwargs = dict(dimension_semantics=("parallel",))
    if vmem_needed > (12 << 20):
        cp_kwargs["vmem_limit_bytes"] = int(vmem_needed * 1.5)

    out = pl.pallas_call(
        kernel,
        out_shape=jax.ShapeDtypeStruct((B_pad, out_w), jnp.float32),
        grid=grid,
        in_specs=[
            pl.BlockSpec((tb, S), lambda i: (i, 0)),         # state: tiled over B
            pl.BlockSpec((S, out_w), lambda i: (0, 0)),      # fused weight: resident
            pl.BlockSpec((1, out_w), lambda i: (0, 0)),      # fused bias: resident
            pl.BlockSpec((out_w, out_w), lambda i: (0, 0)),  # b2 hidden weight: resident
            pl.BlockSpec((1, out_w), lambda i: (0, 0)),      # b2 hidden bias: resident
        ],
        out_specs=pl.BlockSpec((tb, out_w), lambda i: (i, 0)),
        compiler_params=pltpu.CompilerParams(**cp_kwargs),
    )(state_p, params["w_cat"], params["b_cat"], params["b2h_w_pad"], params["b2h_b_pad"])

    if B_pad != B:
        out = out[:B]

    o1 = w1_size
    o2 = o1 + w2_size
    o3 = o2 + b1_size
    w1_shape = hyper_shapes["w1_shape"]
    w2_shape = hyper_shapes["w2_shape"]
    # NOTE: these slices/reshapes fuse into consumers under jit; callers that
    # can consume the packed slab + static offsets should use `out` directly.
    return {
        "w1": out[:, 0:o1].reshape(B, w1_shape[0], w1_shape[1]),
        "b1": out[:, o2:o3].reshape(B, 1, hyper_shapes["b1_shape"][0]),
        "w2": out[:, o1:o2].reshape(B, w2_shape[0], w2_shape[1]),
        "b2": out[:, cat_cols:cat_cols + b2_size].reshape(
            B, 1, hyper_shapes["b2_shape"][0]
        ),
    }


# ----------------------------------------------------------------------------
# Parameter init: per-layer xavier weights (like reset_parameters) plus the
# packed / padded tensors the kernel actually consumes.
# ----------------------------------------------------------------------------
def init_params(key, shape_state, hyper_shapes, b2_hidden):
    def xavier(k, fan_in, fan_out):
        limit = jnp.sqrt(6.0 / (fan_in + fan_out))
        # stored (in, out) so the kernel computes state @ W
        return jax.random.uniform(
            k, (fan_in, fan_out), minval=-limit, maxval=limit, dtype=jnp.float32
        )

    def small_bias(k, n):
        return jax.random.uniform(k, (1, n), minval=-0.1, maxval=0.1, dtype=jnp.float32)

    ks = jax.random.split(key, 10)
    w1_size = hyper_shapes["w1_size"]
    w2_size = hyper_shapes["w2_size"]
    b1_size = hyper_shapes["b1_size"]
    b2_size = hyper_shapes["b2_size"]

    raw = {
        "w1_w": xavier(ks[0], shape_state, w1_size),
        "w1_b": small_bias(ks[1], w1_size),
        "w2_w": xavier(ks[2], shape_state, w2_size),
        "w2_b": small_bias(ks[3], w2_size),
        "b1_w": xavier(ks[4], shape_state, b1_size),
        "b1_b": small_bias(ks[5], b1_size),
        "b2i_w": xavier(ks[6], shape_state, b2_hidden),
        "b2i_b": small_bias(ks[7], b2_hidden),
        "b2h_w": xavier(ks[8], b2_hidden, b2_size),
        "b2h_b": small_bias(ks[9], b2_size),
    }

    # ---- pack for the kernel -------------------------------------------------
    cat_cols = w1_size + w2_size + b1_size + b2_hidden
    out_width = _round_up(cat_cols + b2_size, 128)   # b2 folded into padding lanes

    w_cat = jnp.zeros((shape_state, out_width), jnp.float32)
    b_cat = jnp.zeros((1, out_width), jnp.float32)
    off = 0
    for w_name, b_name, n in (
        ("w1_w", "w1_b", w1_size),
        ("w2_w", "w2_b", w2_size),
        ("b1_w", "b1_b", b1_size),
        ("b2i_w", "b2i_b", b2_hidden),
    ):
        w_cat = w_cat.at[:, off:off + n].set(raw[w_name])
        b_cat = b_cat.at[:, off:off + n].set(raw[b_name])
        off += n

    h_start = w1_size + w2_size + b1_size
    b2h_w_pad = jnp.zeros((out_width, out_width), jnp.float32)
    b2h_w_pad = b2h_w_pad.at[
        h_start:h_start + b2_hidden, cat_cols:cat_cols + b2_size
    ].set(raw["b2h_w"])
    b2h_b_pad = jnp.zeros((1, out_width), jnp.float32)
    b2h_b_pad = b2h_b_pad.at[:, cat_cols:cat_cols + b2_size].set(raw["b2h_b"])

    packed = {
        "w_cat": w_cat,
        "b_cat": b_cat,
        "b2h_w_pad": b2h_w_pad,
        "b2h_b_pad": b2h_b_pad,
    }
    return {**raw, **packed}


if __name__ == "__main__":
    # Small, module-consistent shapes.
    B = 8                 # batch of states
    shape_state = 32      # state dim
    b2_hidden = 32        # args.shape_hyper_b2_hidden
    hyper_shapes = {
        "w1_shape": (8, 16), "w1_size": 8 * 16,
        "w2_shape": (16, 4), "w2_size": 16 * 4,
        "b1_shape": (16,),   "b1_size": 16,
        "b2_shape": (4,),    "b2_size": 4,
    }

    key = jax.random.PRNGKey(0)
    k_state, k_params = jax.random.split(key)
    state = jax.random.normal(k_state, (B, shape_state), dtype=jnp.float32)
    params = init_params(k_params, shape_state, hyper_shapes, b2_hidden)

    out = hyper_network_forward(state, params, hyper_shapes, b2_hidden)
    out = jax.block_until_ready(out)

    # Pure-JAX reference (same math as the PyTorch module, no Pallas).
    ref_w1 = jnp.abs(state @ params["w1_w"] + params["w1_b"]).reshape(B, 8, 16)
    ref_w2 = jnp.abs(state @ params["w2_w"] + params["w2_b"]).reshape(B, 16, 4)
    ref_b1 = (state @ params["b1_w"] + params["b1_b"]).reshape(B, 1, 16)
    ref_h = jnp.maximum(state @ params["b2i_w"] + params["b2i_b"], 0.0)
    ref_b2 = (ref_h @ params["b2h_w"] + params["b2h_b"]).reshape(B, 1, 4)

    assert jnp.allclose(out["w1"], ref_w1, atol=1e-5)
    assert jnp.allclose(out["w2"], ref_w2, atol=1e-5)
    assert jnp.allclose(out["b1"], ref_b1, atol=1e-5)
    assert jnp.allclose(out["b2"], ref_b2, atol=1e-5)

    print("KERNEL_OK")
</pallas_src>

<mosaic_0001>
module attributes {stable_mosaic.version = 11 : i64} {
  func.func @hyper_net_kernel(%arg0: i32, %arg1: memref<8x32xf32, #tpu.memory_space<vmem>>, %arg2: memref<32x256xf32, #tpu.memory_space<vmem>>, %arg3: memref<1x256xf32, #tpu.memory_space<vmem>>, %arg4: memref<256x256xf32, #tpu.memory_space<vmem>>, %arg5: memref<1x256xf32, #tpu.memory_space<vmem>>, %arg6: memref<8x256xf32, #tpu.memory_space<vmem>>) attributes {dimension_semantics = [#tpu.dimension_semantics<parallel>], iteration_bounds = array<i64: 1>, scalar_prefetch = 0 : i64, scratch_operands = 0 : i64, tpu.core_type = #tpu.core_type<tc>, window_params = [{transform_indices = @transform_0, window_bounds = array<i64: 8, 32>}, {pipeline_mode = #tpu.pipeline_mode<synchronous>, transform_indices = @transform_1, window_bounds = array<i64: 32, 256>}, {pipeline_mode = #tpu.pipeline_mode<synchronous>, transform_indices = @transform_2, window_bounds = array<i64: 1, 256>}, {pipeline_mode = #tpu.pipeline_mode<synchronous>, transform_indices = @transform_3, window_bounds = array<i64: 256, 256>}, {pipeline_mode = #tpu.pipeline_mode<synchronous>, transform_indices = @transform_4, window_bounds = array<i64: 1, 256>}, {transform_indices = @transform_5, window_bounds = array<i64: 8, 256>}]} {
    %c0 = arith.constant 0 : index
    %c0_0 = arith.constant 0 : index
    %0 = vector.load %arg1[%c0, %c0_0] : memref<8x32xf32, #tpu.memory_space<vmem>>, vector<8x32xf32>
    %c0_1 = arith.constant 0 : index
    %c0_2 = arith.constant 0 : index
    %1 = vector.load %arg2[%c0_1, %c0_2] : memref<32x256xf32, #tpu.memory_space<vmem>>, vector<32x256xf32>
    %cst = arith.constant dense<0.000000e+00> : vector<8x256xf32>
    %2 = tpu.matmul %0, %1, %cst {dimension_numbers = #tpu.dot_dimension_numbers<[1], [0], [0], [1], [0, 0, 1, 1], [], []>} : vector<8x32xf32>, vector<32x256xf32>, vector<8x256xf32> -> vector<8x256xf32>
    %c0_3 = arith.constant 0 : index
    %c0_4 = arith.constant 0 : index
    %3 = vector.load %arg3[%c0_3, %c0_4] : memref<1x256xf32, #tpu.memory_space<vmem>>, vector<1x256xf32>
    %4 = vector.broadcast %3 : vector<1x256xf32> to vector<8x256xf32>
    %5 = arith.addf %2, %4 : vector<8x256xf32>
    %6 = tpu.iota {dimensions = array<i32: 1>} : vector<8x256xi32>
    %c192_i32 = arith.constant 192 : i32
    %7 = vector.broadcast %c192_i32 : i32 to vector<8x256xi32>
    %8 = arith.cmpi slt, %6, %7 : vector<8x256xi32>
    %9 = math.absf %5 : vector<8x256xf32>
    %c240_i32 = arith.constant 240 : i32
    %10 = vector.broadcast %c240_i32 : i32 to vector<8x256xi32>
    %11 = arith.cmpi slt, %6, %10 : vector<8x256xi32>
    %cst_5 = arith.constant 0.000000e+00 : f32
    %12 = vector.broadcast %cst_5 : f32 to vector<8x256xf32>
    %13 = arith.select %11, %5, %12 : vector<8x256xi1>, vector<8x256xf32>
    %14 = arith.select %8, %9, %13 : vector<8x256xi1>, vector<8x256xf32>
    %cst_6 = arith.constant 0.000000e+00 : f32
    %15 = vector.broadcast %cst_6 : f32 to vector<8x256xf32>
    %16 = arith.maximumf %5, %15 : vector<8x256xf32>
    %c0_7 = arith.constant 0 : index
    %c0_8 = arith.constant 0 : index
    %17 = vector.load %arg4[%c0_7, %c0_8] : memref<256x256xf32, #tpu.memory_space<vmem>>, vector<256x256xf32>
    %cst_9 = arith.constant dense<0.000000e+00> : vector<8x256xf32>
    %18 = tpu.matmul %16, %17, %cst_9 {dimension_numbers = #tpu.dot_dimension_numbers<[1], [0], [0], [1], [0, 0, 1, 1], [], []>} : vector<8x256xf32>, vector<256x256xf32>, vector<8x256xf32> -> vector<8x256xf32>
    %c0_10 = arith.constant 0 : index
    %c0_11 = arith.constant 0 : index
    %19 = vector.load %arg5[%c0_10, %c0_11] : memref<1x256xf32, #tpu.memory_space<vmem>>, vector<1x256xf32>
    %20 = vector.broadcast %19 : vector<1x256xf32> to vector<8x256xf32>
    %21 = arith.addf %18, %20 : vector<8x256xf32>
    %22 = arith.addf %14, %21 : vector<8x256xf32>
    %c0_12 = arith.constant 0 : index
    %c0_13 = arith.constant 0 : index
    %23 = vector.load %arg6[%c0_12, %c0_13] : memref<8x256xf32, #tpu.memory_space<vmem>>, vector<8x256xf32>
    tpu.vector_store %arg6[%c0_12, %c0_13], %22 {strides = array<i32>} : memref<8x256xf32, #tpu.memory_space<vmem>>, vector<8x256xf32>,
    return
  }
  func.func @transform_0(%arg0: i32) -> (i32, i32) {
    %c0_i32 = arith.constant 0 : i32
    %c0_i32_0 = arith.constant 0 : i32
    return %arg0, %c0_i32 : i32, i32
  }
  func.func @transform_1(%arg0: i32) -> (i32, i32) {
    %c0_i32 = arith.constant 0 : i32
    %c0_i32_0 = arith.constant 0 : i32
    %c0_i32_1 = arith.constant 0 : i32
    return %c0_i32, %c0_i32_0 : i32, i32
  }
  func.func @transform_2(%arg0: i32) -> (i32, i32) {
    %c0_i32 = arith.constant 0 : i32
    %c0_i32_0 = arith.constant 0 : i32
    %c0_i32_1 = arith.constant 0 : i32
    return %c0_i32, %c0_i32_0 : i32, i32
  }
  func.func @transform_3(%arg0: i32) -> (i32, i32) {
    %c0_i32 = arith.constant 0 : i32
    %c0_i32_0 = arith.constant 0 : i32
    %c0_i32_1 = arith.constant 0 : i32
    return %c0_i32, %c0_i32_0 : i32, i32
  }
  func.func @transform_4(%arg0: i32) -> (i32, i32) {
    %c0_i32 = arith.constant 0 : i32
    %c0_i32_0 = arith.constant 0 : i32
    %c0_i32_1 = arith.constant 0 : i32
    return %c0_i32, %c0_i32_0 : i32, i32
  }
  func.func @transform_5(%arg0: i32) -> (i32, i32) {
    %c0_i32 = arith.constant 0 : i32
    %c0_i32_0 = arith.constant 0 : i32
    return %arg0, %c0_i32 : i32, i32
  }
}

</mosaic_0001>

<llo_original>
// kernel: tpu_custom_call.1
$region0: #{tpu_custom_call.1}
  #allocation0 [shape = 'u32[]', space=smem, size = 0x4, offset = 0x4, fixed_abs, tag = 'smem constant byte address 0x4 - core index']
  #allocation1 [shape = 'u32[144,128]{1,0:T(1,128)}', space=vmem, size = 0x12000, scoped, tag = 'internal scratch']
  %s0 = inlined_call_operand.hbm [shape: f32[8,32], index: 0, kind: input, shape index: {}]
  %s1 = inlined_call_operand.hbm [shape: f32[32,256], index: 1, kind: input, shape index: {}]
  %s2 = inlined_call_operand.vmem [shape: f32[1,256], index: 2, kind: input, shape index: {}]
  %s3 = inlined_call_operand.hbm [shape: f32[256,256], index: 3, kind: input, shape index: {}]
  %s4 = inlined_call_operand.vmem [shape: f32[1,256], index: 4, kind: input, shape index: {}]
  %s5 = inlined_call_operand.hbm [shape: f32[8,256], index: 5, kind: output, shape index: {}]
  %s6 = sld [smem:[#allocation0]]
  $region42: #{tpu_custom_call.1} parent=0
    _
  %s8 = ssub.s32 1, %s6
  %s9 = scalar_select 0, %s8, %s6
  $region1: #{tpu_custom_call.1} parent=0
    #allocation2 [shape = 'u8[4096]{0}', space=vmem, size = 0x1000, scoped, tag = 'input window, operand 0, single buffered']
    #allocation3 [shape = 's32[1]{0}', space=sflag, size = 0x4, scoped, tag = 'scoped memory for tpu_custom_call.1']
    #allocation4 [shape = 's32[1]{0}', space=sflag, size = 0x4, scoped, tag = 'scoped memory for tpu_custom_call.1']
    #allocation5 [shape = 'u8[32768]{0}', space=vmem, size = 0x8000, scoped, tag = 'input window, operand 1, single buffered']
    #allocation6 [shape = 's32[1]{0}', space=sflag, size = 0x4, scoped, tag = 'scoped memory for tpu_custom_call.1']
    #allocation7 [shape = 'u8[262144]{0}', space=vmem, size = 0x40000, scoped, tag = 'input window, operand 3, single buffered']
    #allocation8 [shape = 'u8[8192]{0}', space=vmem, size = 0x2000, scoped, tag = 'output window, operand 0, single buffered']
    %10 = vsyncpa [#allocation3], 0
    %11 = vsyncpa [#allocation6], 0
    %12 = vsyncpa [#allocation4], 0
    // Predicated region
    $region2: #{tpu_custom_call.1} parent=1 // pred_check
      _
    $region3: #{tpu_custom_call.1} parent=1 // pred_check_branch
      %14 = sbr.rel (0) target = $region5
    $region4: #{tpu_custom_call.1} parent=1 // pred_region
      %s16 = ssub.s32 128, 128
      %17 = vsyncadd [#allocation3], %s16
      %s19 = sshll.u32 [#allocation2], 4
      %s20 = int_to_ptr.vmem [resolvable:$true] %s19
      %22 = dma.hbm_to_vmem [thread:$0]  %s0, 128, %s20, [#allocation3]
    $region5: #{tpu_custom_call.1} parent=1 // pred_fallthru
      _
    // Predicated region
    $region6: #{tpu_custom_call.1} parent=1 // pred_check
      _
    $region7: #{tpu_custom_call.1} parent=1 // pred_check_branch
      %24 = sbr.rel (0) target = $region9
    $region8: #{tpu_custom_call.1} parent=1 // pred_region
      %s26 = ssub.s32 1024, 1024
      %27 = vsyncadd [#allocation6], %s26
      %s28 = sshll.u32 [#allocation5], 4
      %s29 = int_to_ptr.vmem [resolvable:$true] %s28
      %34 = dma.hbm_to_vmem [thread:$0]  %s1, 1024, %s29, [#allocation6], 256, 256, 16
    $region9: #{tpu_custom_call.1} parent=1 // pred_fallthru
      _
    // Predicated region
    $region10: #{tpu_custom_call.1} parent=1 // pred_check
      _
    $region11: #{tpu_custom_call.1} parent=1 // pred_check_branch
      %36 = sbr.rel (0) target = $region13
    $region12: #{tpu_custom_call.1} parent=1 // pred_region
      _
    $region13: #{tpu_custom_call.1} parent=1 // pred_fallthru
      _
    // Predicated region
    $region14: #{tpu_custom_call.1} parent=1 // pred_check
      _
    $region15: #{tpu_custom_call.1} parent=1 // pred_check_branch
      %38 = sbr.rel (0) target = $region17
    $region16: #{tpu_custom_call.1} parent=1 // pred_region
      %s40 = ssub.s32 8192, 8192
      %41 = vsyncadd [#allocation6], %s40
      %s42 = sshll.u32 [#allocation7], 4
      %s43 = int_to_ptr.vmem [resolvable:$true] %s42
      %48 = dma.hbm_to_vmem [thread:$0]  %s3, 8192, %s43, [#allocation6], 256, 256, 16
    $region17: #{tpu_custom_call.1} parent=1 // pred_fallthru
      _
    // Predicated region
    $region18: #{tpu_custom_call.1} parent=1 // pred_check
      _
    $region19: #{tpu_custom_call.1} parent=1 // pred_check_branch
      %50 = sbr.rel (0) target = $region21
    $region20: #{tpu_custom_call.1} parent=1 // pred_region
      _
    $region21: #{tpu_custom_call.1} parent=1 // pred_fallthru
      _
    // Predicated region
    $region22: #{tpu_custom_call.1} parent=1 // pred_check
      _
    $region23: #{tpu_custom_call.1} parent=1 // pred_check_branch
      %52 = sbr.rel (0) target = $region25
    $region24: #{tpu_custom_call.1} parent=1 // pred_region
      %53 = dma.done [#allocation3], 128
    $region25: #{tpu_custom_call.1} parent=1 // pred_fallthru
      _
    // Predicated region
    $region26: #{tpu_custom_call.1} parent=1 // pred_check
      _
    $region27: #{tpu_custom_call.1} parent=1 // pred_check_branch
      %55 = sbr.rel (0) target = $region29
    $region28: #{tpu_custom_call.1} parent=1 // pred_region
      %56 = dma.done [#allocation6], 1024
    $region29: #{tpu_custom_call.1} parent=1 // pred_fallthru
      _
    // Predicated region
    $region30: #{tpu_custom_call.1} parent=1 // pred_check
      _
    $region31: #{tpu_custom_call.1} parent=1 // pred_check_branch
      %58 = sbr.rel (0) target = $region33
    $region32: #{tpu_custom_call.1} parent=1 // pred_region
      %59 = dma.done [#allocation6], 8192
    $region33: #{tpu_custom_call.1} parent=1 // pred_fallthru
      _
    %v60 = vld [vmem:[#allocation2] sm:$0xff]
    %v61 = vld [vmem:[#allocation5] sm:$0xff]
    %v62 = vld [vmem:[#allocation5 + $0x8] sm:$0xff]
    %v63 = vld [vmem:[#allocation5 + $0x10] sm:$0xff]
    %v64 = vld [vmem:[#allocation5 + $0x18] sm:$0xff]
    %v65 = vld [vmem:[#allocation5 + $0x20] sm:$0xff]
    %v66 = vld [vmem:[#allocation5 + $0x28] sm:$0xff]
    %v67 = vld [vmem:[#allocation5 + $0x30] sm:$0xff]
    %v68 = vld [vmem:[#allocation5 + $0x38] sm:$0xff]
    %v69 = vld [vmem:[%s2] sm:$0x3]
    %v71 = vlaneseq
    %v72 = vshrl.u32 %v71, 7
    %v73 = vsub.s32 0, %v72
    %v74 = vrot.slane %v69, %v73
    %v75 = vlaneseq
    %v76 = vshrl.u32 %v75, 7
    %v77 = vsub.s32 1, %v76
    %v78 = vrot.slane %v69, %v77
    %vm81 = vcmask 261120
    %v83 = vsel %vm81, %v60, 0
    %85 = vmatprep.subr.mxu0 0.0
    %86 = vmatpush1.msra.mxu0 0.0
    %87 = vmatprep.subr.mxu0 0.0
    %88 = vmatpush1.msra.mxu0 0.0
    %89 = vmatprep.subr.mxu0 0.0
    %90 = vmatpush1.msra.mxu0 0.0
    %91 = vmatprep.subr.mxu0 0.0
    %92 = vmatpush1.msra.mxu0 0.0
    %93 = vmatprep.subr.mxu0 0.0
    %94 = vmatpush1.msra.mxu0 0.0
    %95 = vmatprep.subr.mxu0 0.0
    %96 = vmatpush1.msra.mxu0 0.0
    %97 = vmatprep.subr.mxu0 0.0
    %98 = vmatpush1.msra.mxu0 0.0
    %99 = vmatprep.subr.mxu0 0.0
    %100 = vmatpush1.msra.mxu0 0.0
    %101 = vmatprep.subr.mxu0 0.0
    %102 = vmatpush1.msra.mxu0 0.0
    %103 = vmatprep.subr.mxu0 0.0
    %104 = vmatpush1.msra.mxu0 0.0
    %105 = vmatprep.subr.mxu0 0.0
    %106 = vmatpush1.msra.mxu0 0.0
    %107 = vmatprep.subr.mxu0 0.0
    %108 = vmatpush1.msra.mxu0 0.0
    %109 = vmatprep.subr.mxu0 %v68
    %110 = vmatpush1.msra.mxu0 %v67
    %111 = vmatprep.subr.mxu0 %v66
    %112 = vmatpush1.msra.mxu0 %v65
    %113 = vmatprep.subr.mxu0 %v64
    %114 = vmatpush1.msra.mxu0 %v63
    %115 = vmatprep.subr.mxu0 %v62
    %116 = vmatpush1.msra.mxu0 %v61
    %117 = vmatprep.subr.mxu0 0.0
    %118 = vmatpush2.msra.mxu0 0.0
    %119 = vmatprep.subr.mxu0 0.0
    %120 = vmatpush2.msra.mxu0 0.0
    %121 = vmatprep.subr.mxu0 0.0
    %122 = vmatpush2.msra.mxu0 0.0
    %123 = vmatprep.subr.mxu0 0.0
    %124 = vmatpush2.msra.mxu0 0.0
    %125 = vmatprep.subr.mxu0 0.0
    %126 = vmatpush2.msra.mxu0 0.0
    %127 = vmatprep.subr.mxu0 0.0
    %128 = vmatpush2.msra.mxu0 0.0
    %129 = vmatprep.subr.mxu0 0.0
    %130 = vmatpush2.msra.mxu0 0.0
    %131 = vmatprep.subr.mxu0 0.0
    %132 = vmatpush2.msra.mxu0 0.0
    %133 = vmatprep.subr.mxu0 0.0
    %134 = vmatpush2.msra.mxu0 0.0
    %135 = vmatprep.subr.mxu0 0.0
    %136 = vmatpush2.msra.mxu0 0.0
    %137 = vmatprep.subr.mxu0 0.0
    %138 = vmatpush2.msra.mxu0 0.0
    %139 = vmatprep.subr.mxu0 0.0
    %140 = vmatpush2.msra.mxu0 0.0
    %141 = vmatprep.subr.mxu0 0.0
    %142 = vmatpush2.msra.mxu0 0.0
    %143 = vmatprep.subr.mxu0 0.0
    %144 = vmatpush2.msra.mxu0 0.0
    %145 = vmatprep.subr.mxu0 0.0
    %146 = vmatpush2.msra.mxu0 0.0
    %147 = vmatprep.subr.mxu0 0.0
    %148 = vmatpush2.msra.mxu0 0.0
    %149 = vmatprep.mubr.f32.mxu0 0.0
    %150 = vmatmul.mubr.f32.gmra.mxu0 %v83
    %v151 = vpop.f32.mrf.mxu0
    %v152 = vadd.f32 %v74, %v151
    %v153 = vpop.f32.mrf.mxu0
    %v154 = vadd.f32 %v78, %v153
    %155 = vdwg.mxu0
    %v156 = vlaneseq
    %v157 = vand.u32 %v156, 127
    %v158 = vadd.s32 %v157, 128
    %vm159 = vcmp.lt.s32.totalorder %v157, 192
    %vm160 = vcmp.lt.s32.totalorder %v158, 192
    %v161 = vand.u32 2147483647, %v152
    %v162 = vand.u32 2147483647, %v154
    %vm163 = vcmp.lt.s32.totalorder %v157, 240
    %vm164 = vcmp.lt.s32.totalorder %v158, 240
    %v165 = vsel %vm163, %v152, 0.0
    %v166 = vsel %vm164, %v154, 0.0
    %v167 = vsel %vm159, %v161, %v165
    %v168 = vsel %vm160, %v162, %v166
    %v169 = vmax.f32 %v152, 0.0
    %v170 = vmax.f32 %v154, 0.0
    %v171 = vld [vmem:[#allocation7] sm:$0xff]
    %v172 = vld [vmem:[#allocation7 + $0x8] sm:$0xff]
    %v173 = vld [vmem:[#allocation7 + $0x10] sm:$0xff]
    %v174 = vld [vmem:[#allocation7 + $0x18] sm:$0xff]
    %v175 = vld [vmem:[#allocation7 + $0x20] sm:$0xff]
    %v176 = vld [vmem:[#allocation7 + $0x28] sm:$0xff]
    %v177 = vld [vmem:[#allocation7 + $0x30] sm:$0xff]
    %v178 = vld [vmem:[#allocation7 + $0x38] sm:$0xff]
    %v179 = vld [vmem:[#allocation7 + $0x40] sm:$0xff]
    %v180 = vld [vmem:[#allocation7 + $0x48] sm:$0xff]
    %v181 = vld [vmem:[#allocation7 + $0x50] sm:$0xff]
    %v182 = vld [vmem:[#allocation7 + $0x58] sm:$0xff]
    %v183 = vld [vmem:[#allocation7 + $0x60] sm:$0xff]
    %v184 = vld [vmem:[#allocation7 + $0x68] sm:$0xff]
    %v185 = vld [vmem:[#allocation7 + $0x70] sm:$0xff]
    %v186 = vld [vmem:[#allocation7 + $0x78] sm:$0xff]
    %v187 = vld [vmem:[#allocation7 + $0x80] sm:$0xff]
    %v188 = vld [vmem:[#allocation7 + $0x88] sm:$0xff]
    %v189 = vld [vmem:[#allocation7 + $0x90] sm:$0xff]
    %v190 = vld [vmem:[#allocation7 + $0x98] sm:$0xff]
    %v191 = vld [vmem:[#allocation7 + $0xa0] sm:$0xff]
    %v192 = vld [vmem:[#allocation7 + $0xa8] sm:$0xff]
    %v193 = vld [vmem:[#allocation7 + $0xb0] sm:$0xff]
    %v194 = vld [vmem:[#allocation7 + $0xb8] sm:$0xff]
    %v195 = vld [vmem:[#allocation7 + $0xc0] sm:$0xff]
    %v196 = vld [vmem:[#allocation7 + $0xc8] sm:$0xff]
    %v197 = vld [vmem:[#allocation7 + $0xd0] sm:$0xff]
    %v198 = vld [vmem:[#allocation7 + $0xd8] sm:$0xff]
    %v199 = vld [vmem:[#allocation7 + $0xe0] sm:$0xff]
    %v200 = vld [vmem:[#allocation7 + $0xe8] sm:$0xff]
    %v201 = vld [vmem:[#allocation7 + $0xf0] sm:$0xff]
    %v202 = vld [vmem:[#allocation7 + $0xf8] sm:$0xff]
    %v203 = vld [vmem:[#allocation7 + $0x100] sm:$0xff]
    %v204 = vld [vmem:[#allocation7 + $0x108] sm:$0xff]
    %v205 = vld [vmem:[#allocation7 + $0x110] sm:$0xff]
    %v206 = vld [vmem:[#allocation7 + $0x118] sm:$0xff]
    %v207 = vld [vmem:[#allocation7 + $0x120] sm:$0xff]
    %v208 = vld [vmem:[#allocation7 + $0x128] sm:$0xff]
    %v209 = vld [vmem:[#allocation7 + $0x130] sm:$0xff]
    %v210 = vld [vmem:[#allocation7 + $0x138] sm:$0xff]
    %v211 = vld [vmem:[#allocation7 + $0x140] sm:$0xff]
    %v212 = vld [vmem:[#allocation7 + $0x148] sm:$0xff]
    %v213 = vld [vmem:[#allocation7 + $0x150] sm:$0xff]
    %v214 = vld [vmem:[#allocation7 + $0x158] sm:$0xff]
    %v215 = vld [vmem:[#allocation7 + $0x160] sm:$0xff]
    %v216 = vld [vmem:[#allocation7 + $0x168] sm:$0xff]
    %v217 = vld [vmem:[#allocation7 + $0x170] sm:$0xff]
    %v218 = vld [vmem:[#allocation7 + $0x178] sm:$0xff]
    %v219 = vld [vmem:[#allocation7 + $0x180] sm:$0xff]
    %v220 = vld [vmem:[#allocation7 + $0x188] sm:$0xff]
    %v221 = vld [vmem:[#allocation7 + $0x190] sm:$0xff]
    %v222 = vld [vmem:[#allocation7 + $0x198] sm:$0xff]
    %v223 = vld [vmem:[#allocation7 + $0x1a0] sm:$0xff]
    %v224 = vld [vmem:[#allocation7 + $0x1a8] sm:$0xff]
    %v225 = vld [vmem:[#allocation7 + $0x1b0] sm:$0xff]
    %v226 = vld [vmem:[#allocation7 + $0x1b8] sm:$0xff]
    %v227 = vld [vmem:[#allocation7 + $0x1c0] sm:$0xff]
    %v228 = vld [vmem:[#allocation7 + $0x1c8] sm:$0xff]
    %v229 = vld [vmem:[#allocation7 + $0x1d0] sm:$0xff]
    %v230 = vld [vmem:[#allocation7 + $0x1d8] sm:$0xff]
    %v231 = vld [vmem:[#allocation7 + $0x1e0] sm:$0xff]
    %v232 = vld [vmem:[#allocation7 + $0x1e8] sm:$0xff]
    %v233 = vld [vmem:[#allocation7 + $0x1f0] sm:$0xff]
    %v234 = vld [vmem:[#allocation7 + $0x1f8] sm:$0xff]
    %v235 = vld [vmem:[%s4] sm:$0x3]
    %v237 = vlaneseq
    %v238 = vshrl.u32 %v237, 7
    %v239 = vsub.s32 0, %v238
    %v240 = vrot.slane %v235, %v239
    %v241 = vlaneseq
    %v242 = vshrl.u32 %v241, 7
    %v243 = vsub.s32 1, %v242
    %v244 = vrot.slane %v235, %v243
    %247 = vmatprep.subr.mxu0 %v202
    %248 = vmatpush1.msra.mxu0 %v201
    %249 = vmatprep.subr.mxu0 %v200
    %250 = vmatpush1.msra.mxu0 %v199
    %251 = vmatprep.subr.mxu0 %v198
    %252 = vmatpush1.msra.mxu0 %v197
    %253 = vmatprep.subr.mxu0 %v196
    %254 = vmatpush1.msra.mxu0 %v195
    %255 = vmatprep.subr.mxu0 %v194
    %256 = vmatpush1.msra.mxu0 %v193
    %257 = vmatprep.subr.mxu0 %v192
    %258 = vmatpush1.msra.mxu0 %v191
    %259 = vmatprep.subr.mxu0 %v190
    %260 = vmatpush1.msra.mxu0 %v189
    %261 = vmatprep.subr.mxu0 %v188
    %262 = vmatpush1.msra.mxu0 %v187
    %263 = vmatprep.subr.mxu0 %v186
    %264 = vmatpush1.msra.mxu0 %v185
    %265 = vmatprep.subr.mxu0 %v184
    %266 = vmatpush1.msra.mxu0 %v183
    %267 = vmatprep.subr.mxu0 %v182
    %268 = vmatpush1.msra.mxu0 %v181
    %269 = vmatprep.subr.mxu0 %v180
    %270 = vmatpush1.msra.mxu0 %v179
    %271 = vmatprep.subr.mxu0 %v178
    %272 = vmatpush1.msra.mxu0 %v177
    %273 = vmatprep.subr.mxu0 %v176
    %274 = vmatpush1.msra.mxu0 %v175
    %275 = vmatprep.subr.mxu0 %v174
    %276 = vmatpush1.msra.mxu0 %v173
    %277 = vmatprep.subr.mxu0 %v172
    %278 = vmatpush1.msra.mxu0 %v171
    %279 = vmatprep.subr.mxu0 %v234
    %280 = vmatpush2.msra.mxu0 %v233
    %281 = vmatprep.subr.mxu0 %v232
    %282 = vmatpush2.msra.mxu0 %v231
    %283 = vmatprep.subr.mxu0 %v230
    %284 = vmatpush2.msra.mxu0 %v229
    %285 = vmatprep.subr.mxu0 %v228
    %286 = vmatpush2.msra.mxu0 %v227
    %287 = vmatprep.subr.mxu0 %v226
    %288 = vmatpush2.msra.mxu0 %v225
    %289 = vmatprep.subr.mxu0 %v224
    %290 = vmatpush2.msra.mxu0 %v223
    %291 = vmatprep.subr.mxu0 %v222
    %292 = vmatpush2.msra.mxu0 %v221
    %293 = vmatprep.subr.mxu0 %v220
    %294 = vmatpush2.msra.mxu0 %v219
    %295 = vmatprep.subr.mxu0 %v218
    %296 = vmatpush2.msra.mxu0 %v217
    %297 = vmatprep.subr.mxu0 %v216
    %298 = vmatpush2.msra.mxu0 %v215
    %299 = vmatprep.subr.mxu0 %v214
    %300 = vmatpush2.msra.mxu0 %v213
    %301 = vmatprep.subr.mxu0 %v212
    %302 = vmatpush2.msra.mxu0 %v211
    %303 = vmatprep.subr.mxu0 %v210
    %304 = vmatpush2.msra.mxu0 %v209
    %305 = vmatprep.subr.mxu0 %v208
    %306 = vmatpush2.msra.mxu0 %v207
    %307 = vmatprep.subr.mxu0 %v206
    %308 = vmatpush2.msra.mxu0 %v205
    %309 = vmatprep.subr.mxu0 %v204
    %310 = vmatpush2.msra.mxu0 %v203
    %311 = vmatprep.mubr.f32.mxu0 %v170
    %312 = vmatmul.mubr.f32.gmra.mxu0 %v169
    %v313 = vpop.f32.mrf.mxu0
    %v314 = vadd.f32 %v240, %v313
    %v315 = vpop.f32.mrf.mxu0
    %v316 = vadd.f32 %v244, %v315
    %317 = vdwg.mxu0
    %v318 = vadd.f32 %v167, %v314
    %v319 = vadd.f32 %v168, %v316
    %320 = vst [vmem:[#allocation8] sm:$0xff] %v318
    %321 = vst [vmem:[#allocation8 + $0x8] sm:$0xff] %v319
    // Predicated region
    $region34: #{tpu_custom_call.1} parent=1 // pred_check
      _
    $region35: #{tpu_custom_call.1} parent=1 // pred_check_branch
      %323 = sbr.rel (0) target = $region37
    $region36: #{tpu_custom_call.1} parent=1 // pred_region
      %s325 = ssub.s32 256, 256
      %326 = vsyncadd [#allocation4], %s325
      %s328 = sshll.u32 [#allocation8], 4
      %s329 = int_to_ptr.vmem [resolvable:$true] %s328
      %331 = dma.vmem_to_hbm [thread:$0]  %s329, 256, %s5, [#allocation4]
    $region37: #{tpu_custom_call.1} parent=1 // pred_fallthru
      _
    // Predicated region
    $region38: #{tpu_custom_call.1} parent=1 // pred_check
      _
    $region39: #{tpu_custom_call.1} parent=1 // pred_check_branch
      %333 = sbr.rel (0) target = $region41
    $region40: #{tpu_custom_call.1} parent=1 // pred_region
      %334 = dma.done [#allocation4], 256
    $region41: #{tpu_custom_call.1} parent=1 // pred_fallthru
      _
    %335 = vsyncpa [#allocation3], 1
    %336 = vsyncpa [#allocation6], 1
    %337 = vsyncpa [#allocation4], 1

</llo_original>
